<compile_context>
chip_gen: v5e
topology: v5e:2x2
jax: 0.10.0
libtpu: 0.0.40
codegen_flags: <defaults>
</compile_context>

<pallas_src>
import functools

import jax
import jax.numpy as jnp
from jax.experimental import pallas as pl
from jax.experimental.pallas import tpu as pltpu


# ----------------------------------------------------------------------------
# PyTorch F.interpolate(bilinear, align_corners=False) interpolation weights.
# ----------------------------------------------------------------------------
def _bilinear_matrix(out_size: int, in_size: int) -> jnp.ndarray:
    """Row-stochastic (out_size, in_size) matrix matching torch bilinear."""
    d = jnp.arange(out_size, dtype=jnp.float32)
    scale = in_size / out_size
    src = (d + 0.5) * scale - 0.5
    src = jnp.maximum(src, 0.0)                       # torch clamps negatives to 0
    i0 = jnp.clip(jnp.floor(src).astype(jnp.int32), 0, in_size - 1)
    i1 = jnp.clip(i0 + 1, 0, in_size - 1)
    t = src - i0.astype(jnp.float32)
    rows = jnp.arange(out_size, dtype=jnp.int32)
    m = jnp.zeros((out_size, in_size), jnp.float32)
    m = m.at[rows, i0].add(1.0 - t)
    m = m.at[rows, i1].add(t)
    return m


# ----------------------------------------------------------------------------
# Fused kernel: resize -> conv(circular) -> LayerNorm+SiLU -> conv(circular).
# All intermediates stay in VMEM; the only HBM traffic per grid step is the
# (Cc, Hin*Win) input block and the (E, H*W) lane-dense output block.
# ----------------------------------------------------------------------------
def _fused_branch_kernel(col_ref, v_ref, rmat_ref, w1_ref, b1_ref, g_ref,
                         be_ref, w2_ref, b2_ref, o_ref, im_ref,
                         *, cc, h, w, k, pad, eps):
    hw = h * w
    col = col_ref[...]                                # (1, HW) int32, j = m % W

    # Column-wrap masks, one per distinct horizontal tap offset.  Hoisted so the
    # broadcasts are not re-emitted inside the unrolled tap loops.
    masks = {}
    for dj in range(k):
        sj = dj - pad
        if sj > 0:
            masks[sj] = col >= (w - sj)
        elif sj < 0:
            masks[sj] = col < (-sj)

    def build_im2col(x):
        """x: (Cc, H*W) f32.  Fills im_ref (K*K*Cc, H*W) with circularly shifted
        copies of x (im2col for a circularly padded KxK convolution)."""
        for di in range(k):
            si = di - pad
            for dj in range(k):
                sj = dj - pad
                base = si * w + sj
                # out[m] = x[(m + base) mod HW] covers the row wrap; columns that
                # cross the W boundary need the neighbouring rotation instead.
                a = pltpu.roll(x, (-base) % hw, axis=1)
                if sj > 0:
                    b = pltpu.roll(x, (-(base - w)) % hw, axis=1)
                    shifted = jnp.where(masks[sj], b, a)
                elif sj < 0:
                    b = pltpu.roll(x, (-(base + w)) % hw, axis=1)
                    shifted = jnp.where(masks[sj], b, a)
                else:
                    shifted = a
                tap = di * k + dj
                im_ref[tap * cc:(tap + 1) * cc, :] = shifted

    def circ_conv(x, w_mat, bias):
        build_im2col(x)
        return jnp.dot(w_mat, im_ref[...],
                       preferred_element_type=jnp.float32) + bias

    # 1) Bilinear resize for all channels at once: one MXU matmul, lanes = H*W.
    resized = jnp.dot(v_ref[0].astype(jnp.float32), rmat_ref[...],
                      preferred_element_type=jnp.float32)         # (Cc, HW)

    # 2) FilteredResize filtering conv (Cc -> Cc), circular padding.
    y = circ_conv(resized, w1_ref[...], b1_ref[...])              # (Cc, HW)

    # 3) LayerNorm over (Cc, H, W) (biased variance, torch semantics) + SiLU.
    n = float(cc * hw)
    mean = jnp.sum(y) / n
    yc = y - mean
    var = jnp.sum(yc * yc) / n
    yn = yc * jax.lax.rsqrt(var + eps)
    yn = yn * g_ref[...] + be_ref[...]
    act = yn * jax.nn.sigmoid(yn)

    # 4) Merge conv (Cc -> embed_dim), circular padding.
    out = circ_conv(act, w2_ref[...], b2_ref[...])                # (E, HW)
    o_ref[0] = out.astype(o_ref.dtype)


def filtered_resize_ln_merge(value, out_hw, params, *, eps=1e-5):
    """FilteredResize (bilinear + conv) -> LayerNorm -> SiLU -> merge conv."""
    B, Cc, Hin, Win = value.shape
    Hout, Wout = out_hw
    K = int(params["resize_w"].shape[-1])
    E = int(params["merge_w"].shape[0])
    assert params["resize_w"].shape == (Cc, Cc, K, K)
    assert params["merge_w"].shape == (E, Cc, K, K)
    # Symmetric (p, p) circular padding matches PyTorch only for odd K.
    assert K % 2 == 1, "kernel_size must be odd for circular padding parity"
    pad = (K - 1) // 2
    HW = Hout * Wout

    # Separable bilinear resize folded into one (Hin*Win, Hout*Wout) matrix.
    rh = _bilinear_matrix(Hout, Hin)                  # (Hout, Hin)
    rw = _bilinear_matrix(Wout, Win)                  # (Wout, Win)
    rmat = jnp.kron(rh, rw).T                         # (Hin*Win, Hout*Wout)

    # Conv weights as (Cout, K*K*Cin): tap-major (di, dj) then ci, matching the
    # im2col row order built inside the kernel.
    w1 = params["resize_w"].transpose(0, 2, 3, 1).reshape(Cc, K * K * Cc)
    b1 = params["resize_b"].reshape(Cc, 1)
    w2 = params["merge_w"].transpose(0, 2, 3, 1).reshape(E, K * K * Cc)
    b2 = params["merge_b"].reshape(E, 1)
    g = params["ln_gamma"].reshape(Cc, HW)
    be = params["ln_beta"].reshape(Cc, HW)

    v_flat = value.reshape(B, Cc, Hin * Win)
    col_ids = (jnp.arange(HW, dtype=jnp.int32) % Wout).reshape(1, HW)

    kern = functools.partial(_fused_branch_kernel, cc=Cc, h=Hout, w=Wout,
                             k=K, pad=pad, eps=eps)
    out = pl.pallas_call(
        kern,
        out_shape=jax.ShapeDtypeStruct((B, E, HW), value.dtype),
        grid=(B,),
        in_specs=[
            pl.BlockSpec((1, HW), lambda b: (0, 0)),                # col index
            pl.BlockSpec((1, Cc, Hin * Win), lambda b: (b, 0, 0)),  # cond value
            pl.BlockSpec((Hin * Win, HW), lambda b: (0, 0)),        # resize mat
            pl.BlockSpec((Cc, K * K * Cc), lambda b: (0, 0)),       # conv1 w
            pl.BlockSpec((Cc, 1), lambda b: (0, 0)),                # conv1 b
            pl.BlockSpec((Cc, HW), lambda b: (0, 0)),               # LN gamma
            pl.BlockSpec((Cc, HW), lambda b: (0, 0)),               # LN beta
            pl.BlockSpec((E, K * K * Cc), lambda b: (0, 0)),        # conv2 w
            pl.BlockSpec((E, 1), lambda b: (0, 0)),                 # conv2 b
        ],
        out_specs=pl.BlockSpec((1, E, HW), lambda b: (b, 0, 0)),    # lane-dense
        scratch_shapes=[pltpu.VMEM((K * K * Cc, HW), jnp.float32)],
        compiler_params=pltpu.CompilerParams(
            dimension_semantics=("parallel",)),   # v7x: 2 TCs split the batch
    )(col_ids, v_flat, rmat, w1, b1, g, be, w2, b2)
    return out.reshape(B, E, Hout, Wout)


# ----------------------------------------------------------------------------
# InterpConvMerge forward
# ----------------------------------------------------------------------------
def interp_conv_merge(x, cond, params):
    """x: (B, C, H, W) NCHW; cond: dict of NCHW tensors."""
    out_spatial_shape = x.shape[-3:-1]                # mirrors the torch module
    pieces = [x]
    for key in sorted(cond.keys()):
        if not key.startswith("channel:"):
            continue
        value = cond[key]
        if value.ndim != x.ndim:
            raise ValueError(
                f"Channel condition `{key}` ndim {value.ndim} != x ndim {x.ndim}")
        if value.shape[-3:-1] != out_spatial_shape:
            value = filtered_resize_ln_merge(value, x.shape[2:], params)
        pieces.append(value)
    # Single concatenation instead of growing x once per condition key.
    return jnp.concatenate(pieces, axis=1) if len(pieces) > 1 else x


# ----------------------------------------------------------------------------
# Pure-JAX reference (for validation only).
# ----------------------------------------------------------------------------
def _reference_branch(value, out_hw, params, eps=1e-5):
    B, Cc, Hin, Win = value.shape
    Hout, Wout = out_hw
    rmat = jnp.kron(_bilinear_matrix(Hout, Hin), _bilinear_matrix(Wout, Win)).T
    resized = (value.reshape(B, Cc, Hin * Win) @ rmat).reshape(B, Cc, Hout, Wout)

    def conv(xx, wgt, bias):
        p = (wgt.shape[-1] - 1) // 2
        xp = jnp.pad(xx, ((0, 0), (0, 0), (p, p), (p, p)), mode="wrap")
        y = jax.lax.conv_general_dilated(
            xp, wgt, window_strides=(1, 1), padding="VALID",
            dimension_numbers=("NCHW", "OIHW", "NCHW"))
        return y + bias[None, :, None, None]

    y = conv(resized, params["resize_w"], params["resize_b"])
    mean = y.mean(axis=(1, 2, 3), keepdims=True)
    var = ((y - mean) ** 2).mean(axis=(1, 2, 3), keepdims=True)
    yn = (y - mean) * jax.lax.rsqrt(var + eps)
    yn = yn * params["ln_gamma"][None] + params["ln_beta"][None]
    act = yn * jax.nn.sigmoid(yn)
    return conv(act, params["merge_w"], params["merge_b"])


if __name__ == "__main__":
    key = jax.random.PRNGKey(0)
    k1, k2, k3, k4, k5, k6, k7, k8 = jax.random.split(key, 8)

    B, C, H, W = 2, 4, 16, 16       # main input
    Cc = 3                          # channels of the coarse condition
    Hc, Wc = 8, 8                   # coarse spatial dims (triggers resize path)
    embed_dim = 6
    K = 3                           # kernel_size

    x = jax.random.normal(k1, (B, C, H, W), jnp.float32)
    cond = {
        # mismatched spatial dims -> resize + conv + LN + SiLU + conv path
        "channel:coarse": jax.random.normal(k2, (B, Cc, Hc, Wc), jnp.float32),
        # matching spatial dims -> concatenated as-is
        "channel:mask": jax.random.normal(k3, (B, C, H, W), jnp.float32),
        # non-"channel:" key -> ignored
        "lead_time": jax.random.normal(k4, (B, C, H, W), jnp.float32),
    }

    params = {
        # FilteredResize conv (in=out=Cc), weight ~ normal (nn.init.normal_)
        "resize_w": 0.2 * jax.random.normal(k5, (Cc, Cc, K, K), jnp.float32),
        "resize_b": 0.05 * jax.random.normal(k6, (Cc,), jnp.float32),
        # LayerNorm affine params at torch default init (ones / zeros)
        "ln_gamma": jnp.ones((Cc, H, W), jnp.float32),
        "ln_beta": jnp.zeros((Cc, H, W), jnp.float32),
        # merge conv (Cc -> embed_dim)
        "merge_w": 0.2 * jax.random.normal(k7, (embed_dim, Cc, K, K), jnp.float32),
        "merge_b": 0.05 * jax.random.normal(k8, (embed_dim,), jnp.float32),
    }

    out = jax.jit(interp_conv_merge)(x, cond, params)
    out = jax.block_until_ready(out)

    expected_channels = C + embed_dim + C    # x + processed coarse + passthrough mask
    assert out.shape == (B, expected_channels, H, W), out.shape
    assert bool(jnp.all(jnp.isfinite(out)))

    # Numerical check against a plain-JAX reference (default TPU matmul
    # precision on both sides -> loose tolerance).
    ref = jnp.concatenate(
        [x, _reference_branch(cond["channel:coarse"], x.shape[2:], params),
         cond["channel:mask"]], axis=1)
    assert jnp.allclose(out, ref, atol=3e-2, rtol=3e-2), \
        float(jnp.max(jnp.abs(out - ref)))

    print("KERNEL_OK")
</pallas_src>

<mosaic_0001>
module attributes {stable_mosaic.version = 11 : i64} {
  func.func @_fused_branch_kernel(%arg0: i32, %arg1: memref<1x256xi32, #tpu.memory_space<vmem>>, %arg2: memref<1x3x64xf32, #tpu.memory_space<vmem>>, %arg3: memref<64x256xf32, #tpu.memory_space<vmem>>, %arg4: memref<3x27xf32, #tpu.memory_space<vmem>>, %arg5: memref<3x1xf32, #tpu.memory_space<vmem>>, %arg6: memref<3x256xf32, #tpu.memory_space<vmem>>, %arg7: memref<3x256xf32, #tpu.memory_space<vmem>>, %arg8: memref<6x27xf32, #tpu.memory_space<vmem>>, %arg9: memref<6x1xf32, #tpu.memory_space<vmem>>, %arg10: memref<1x6x256xf32, #tpu.memory_space<vmem>>, %arg11: memref<27x256xf32, #tpu.memory_space<vmem>>) attributes {dimension_semantics = [#tpu.dimension_semantics<parallel>], iteration_bounds = array<i64: 2>, scalar_prefetch = 0 : i64, scratch_operands = 1 : i64, tpu.core_type = #tpu.core_type<tc>, window_params = [{pipeline_mode = #tpu.pipeline_mode<synchronous>, transform_indices = @transform_0, window_bounds = array<i64: 1, 256>}, {transform_indices = @transform_1, window_bounds = array<i64: 1, 3, 64>}, {pipeline_mode = #tpu.pipeline_mode<synchronous>, transform_indices = @transform_2, window_bounds = array<i64: 64, 256>}, {pipeline_mode = #tpu.pipeline_mode<synchronous>, transform_indices = @transform_3, window_bounds = array<i64: 3, 27>}, {pipeline_mode = #tpu.pipeline_mode<synchronous>, transform_indices = @transform_4, window_bounds = array<i64: 3, 1>}, {pipeline_mode = #tpu.pipeline_mode<synchronous>, transform_indices = @transform_5, window_bounds = array<i64: 3, 256>}, {pipeline_mode = #tpu.pipeline_mode<synchronous>, transform_indices = @transform_6, window_bounds = array<i64: 3, 256>}, {pipeline_mode = #tpu.pipeline_mode<synchronous>, transform_indices = @transform_7, window_bounds = array<i64: 6, 27>}, {pipeline_mode = #tpu.pipeline_mode<synchronous>, transform_indices = @transform_8, window_bounds = array<i64: 6, 1>}, {transform_indices = @transform_9, window_bounds = array<i64: 1, 6, 256>}]} {
    %c0 = arith.constant 0 : index
    %c0_0 = arith.constant 0 : index
    %0 = vector.load %arg1[%c0, %c0_0] : memref<1x256xi32, #tpu.memory_space<vmem>>, vector<1x256xi32>
    %c1_i32 = arith.constant 1 : i32
    %1 = vector.broadcast %c1_i32 : i32 to vector<1x256xi32>
    %2 = arith.cmpi slt, %0, %1 : vector<1x256xi32>
    %c15_i32 = arith.constant 15 : i32
    %3 = vector.broadcast %c15_i32 : i32 to vector<1x256xi32>
    %4 = arith.cmpi sge, %0, %3 : vector<1x256xi32>
    %c0_1 = arith.constant 0 : index
    %c0_2 = arith.constant 0 : index
    %c0_3 = arith.constant 0 : index
    %5 = vector.load %arg2[%c0_1, %c0_2, %c0_3] : memref<1x3x64xf32, #tpu.memory_space<vmem>>, vector<1x3x64xf32>
    %6 = vector.shape_cast %5 : vector<1x3x64xf32> to vector<3x64xf32>
    %c0_4 = arith.constant 0 : index
    %c0_5 = arith.constant 0 : index
    %7 = vector.load %arg3[%c0_4, %c0_5] : memref<64x256xf32, #tpu.memory_space<vmem>>, vector<64x256xf32>
    %cst = arith.constant dense<0.000000e+00> : vector<3x256xf32>
    %8 = tpu.matmul %6, %7, %cst {dimension_numbers = #tpu.dot_dimension_numbers<[1], [0], [0], [1], [0, 0, 1, 1], [], []>} : vector<3x64xf32>, vector<64x256xf32>, vector<3x256xf32> -> vector<3x256xf32>
    %c0_6 = arith.constant 0 : index
    %c0_7 = arith.constant 0 : index
    %9 = vector.load %arg4[%c0_6, %c0_7] : memref<3x27xf32, #tpu.memory_space<vmem>>, vector<3x27xf32>
    %c0_8 = arith.constant 0 : index
    %c0_9 = arith.constant 0 : index
    %10 = vector.load %arg5[%c0_8, %c0_9] : memref<3x1xf32, #tpu.memory_space<vmem>>, vector<3x1xf32>
    %c17_i32 = arith.constant 17 : i32
    %11 = tpu.dynamic_rotate %8 by %c17_i32 dim 1 : vector<3x256xf32>, i32 -> vector<3x256xf32>
    %c1_i32_10 = arith.constant 1 : i32
    %12 = tpu.dynamic_rotate %8 by %c1_i32_10 dim 1 : vector<3x256xf32>, i32 -> vector<3x256xf32>
    %13 = vector.shape_cast %2 : vector<1x256xi1> to vector<1x256xi1>
    %14 = vector.broadcast %13 : vector<1x256xi1> to vector<3x256xi1>
    %15 = arith.select %14, %12, %11 : vector<3x256xi1>, vector<3x256xf32>
    %c0_11 = arith.constant 0 : index
    %c0_12 = arith.constant 0 : index
    %16 = vector.load %arg11[%c0_11, %c0_12] : memref<27x256xf32, #tpu.memory_space<vmem>>, vector<3x256xf32>
    tpu.vector_store %arg11[%c0_11, %c0_12], %15 {strides = array<i32>} : memref<27x256xf32, #tpu.memory_space<vmem>>, vector<3x256xf32>,
    %c16_i32 = arith.constant 16 : i32
    %17 = tpu.dynamic_rotate %8 by %c16_i32 dim 1 : vector<3x256xf32>, i32 -> vector<3x256xf32>
    %c3 = arith.constant 3 : index
    %c0_13 = arith.constant 0 : index
    %18 = vector.load %arg11[%c3, %c0_13] : memref<27x256xf32, #tpu.memory_space<vmem>>, vector<3x256xf32>
    tpu.vector_store %arg11[%c3, %c0_13], %17 {strides = array<i32>} : memref<27x256xf32, #tpu.memory_space<vmem>>, vector<3x256xf32>,
    %c15_i32_14 = arith.constant 15 : i32
    %19 = tpu.dynamic_rotate %8 by %c15_i32_14 dim 1 : vector<3x256xf32>, i32 -> vector<3x256xf32>
    %c31_i32 = arith.constant 31 : i32
    %20 = tpu.dynamic_rotate %8 by %c31_i32 dim 1 : vector<3x256xf32>, i32 -> vector<3x256xf32>
    %21 = vector.shape_cast %4 : vector<1x256xi1> to vector<1x256xi1>
    %22 = vector.broadcast %21 : vector<1x256xi1> to vector<3x256xi1>
    %23 = arith.select %22, %20, %19 : vector<3x256xi1>, vector<3x256xf32>
    %c6 = arith.constant 6 : index
    %c0_15 = arith.constant 0 : index
    %24 = vector.load %arg11[%c6, %c0_15] : memref<27x256xf32, #tpu.memory_space<vmem>>, vector<3x256xf32>
    tpu.vector_store %arg11[%c6, %c0_15], %23 {strides = array<i32>} : memref<27x256xf32, #tpu.memory_space<vmem>>, vector<3x256xf32>,
    %c1_i32_16 = arith.constant 1 : i32
    %25 = tpu.dynamic_rotate %8 by %c1_i32_16 dim 1 : vector<3x256xf32>, i32 -> vector<3x256xf32>
    %c241_i32 = arith.constant 241 : i32
    %26 = tpu.dynamic_rotate %8 by %c241_i32 dim 1 : vector<3x256xf32>, i32 -> vector<3x256xf32>
    %27 = vector.shape_cast %2 : vector<1x256xi1> to vector<1x256xi1>
    %28 = vector.broadcast %27 : vector<1x256xi1> to vector<3x256xi1>
    %29 = arith.select %28, %26, %25 : vector<3x256xi1>, vector<3x256xf32>
    %c9 = arith.constant 9 : index
    %c0_17 = arith.constant 0 : index
    %30 = vector.load %arg11[%c9, %c0_17] : memref<27x256xf32, #tpu.memory_space<vmem>>, vector<3x256xf32>
    tpu.vector_store %arg11[%c9, %c0_17], %29 {strides = array<i32>} : memref<27x256xf32, #tpu.memory_space<vmem>>, vector<3x256xf32>,
    %c0_i32 = arith.constant 0 : i32
    %31 = tpu.dynamic_rotate %8 by %c0_i32 dim 1 : vector<3x256xf32>, i32 -> vector<3x256xf32>
    %c12 = arith.constant 12 : index
    %c0_18 = arith.constant 0 : index
    %32 = vector.load %arg11[%c12, %c0_18] : memref<27x256xf32, #tpu.memory_space<vmem>>, vector<3x256xf32>
    tpu.vector_store %arg11[%c12, %c0_18], %31 {strides = array<i32>} : memref<27x256xf32, #tpu.memory_space<vmem>>, vector<3x256xf32>,
    %c255_i32 = arith.constant 255 : i32
    %33 = tpu.dynamic_rotate %8 by %c255_i32 dim 1 : vector<3x256xf32>, i32 -> vector<3x256xf32>
    %c15_i32_19 = arith.constant 15 : i32
    %34 = tpu.dynamic_rotate %8 by %c15_i32_19 dim 1 : vector<3x256xf32>, i32 -> vector<3x256xf32>
    %35 = vector.shape_cast %4 : vector<1x256xi1> to vector<1x256xi1>
    %36 = vector.broadcast %35 : vector<1x256xi1> to vector<3x256xi1>
    %37 = arith.select %36, %34, %33 : vector<3x256xi1>, vector<3x256xf32>
    %c15 = arith.constant 15 : index
    %c0_20 = arith.constant 0 : index
    %38 = vector.load %arg11[%c15, %c0_20] : memref<27x256xf32, #tpu.memory_space<vmem>>, vector<3x256xf32>
    tpu.vector_store %arg11[%c15, %c0_20], %37 {strides = array<i32>} : memref<27x256xf32, #tpu.memory_space<vmem>>, vector<3x256xf32>,
    %c241_i32_21 = arith.constant 241 : i32
    %39 = tpu.dynamic_rotate %8 by %c241_i32_21 dim 1 : vector<3x256xf32>, i32 -> vector<3x256xf32>
    %c225_i32 = arith.constant 225 : i32
    %40 = tpu.dynamic_rotate %8 by %c225_i32 dim 1 : vector<3x256xf32>, i32 -> vector<3x256xf32>
    %41 = vector.shape_cast %2 : vector<1x256xi1> to vector<1x256xi1>
    %42 = vector.broadcast %41 : vector<1x256xi1> to vector<3x256xi1>
    %43 = arith.select %42, %40, %39 : vector<3x256xi1>, vector<3x256xf32>
    %c18 = arith.constant 18 : index
    %c0_22 = arith.constant 0 : index
    %44 = vector.load %arg11[%c18, %c0_22] : memref<27x256xf32, #tpu.memory_space<vmem>>, vector<3x256xf32>
    tpu.vector_store %arg11[%c18, %c0_22], %43 {strides = array<i32>} : memref<27x256xf32, #tpu.memory_space<vmem>>, vector<3x256xf32>,
    %c240_i32 = arith.constant 240 : i32
    %45 = tpu.dynamic_rotate %8 by %c240_i32 dim 1 : vector<3x256xf32>, i32 -> vector<3x256xf32>
    %c21 = arith.constant 21 : index
    %c0_23 = arith.constant 0 : index
    %46 = vector.load %arg11[%c21, %c0_23] : memref<27x256xf32, #tpu.memory_space<vmem>>, vector<3x256xf32>
    tpu.vector_store %arg11[%c21, %c0_23], %45 {strides = array<i32>} : memref<27x256xf32, #tpu.memory_space<vmem>>, vector<3x256xf32>,
    %c239_i32 = arith.constant 239 : i32
    %47 = tpu.dynamic_rotate %8 by %c239_i32 dim 1 : vector<3x256xf32>, i32 -> vector<3x256xf32>
    %c255_i32_24 = arith.constant 255 : i32
    %48 = tpu.dynamic_rotate %8 by %c255_i32_24 dim 1 : vector<3x256xf32>, i32 -> vector<3x256xf32>
    %49 = vector.shape_cast %4 : vector<1x256xi1> to vector<1x256xi1>
    %50 = vector.broadcast %49 : vector<1x256xi1> to vector<3x256xi1>
    %51 = arith.select %50, %48, %47 : vector<3x256xi1>, vector<3x256xf32>
    %c24 = arith.constant 24 : index
    %c0_25 = arith.constant 0 : index
    %52 = vector.load %arg11[%c24, %c0_25] : memref<27x256xf32, #tpu.memory_space<vmem>>, vector<3x256xf32>
    tpu.vector_store %arg11[%c24, %c0_25], %51 {strides = array<i32>} : memref<27x256xf32, #tpu.memory_space<vmem>>, vector<3x256xf32>,
    %c0_26 = arith.constant 0 : index
    %c0_27 = arith.constant 0 : index
    %53 = vector.load %arg11[%c0_26, %c0_27] : memref<27x256xf32, #tpu.memory_space<vmem>>, vector<27x256xf32>
    %cst_28 = arith.constant dense<0.000000e+00> : vector<3x256xf32>
    %54 = tpu.matmul %9, %53, %cst_28 {dimension_numbers = #tpu.dot_dimension_numbers<[1], [0], [0], [1], [0, 0, 1, 1], [], []>} : vector<3x27xf32>, vector<27x256xf32>, vector<3x256xf32> -> vector<3x256xf32>
    %55 = vector.broadcast %10 : vector<3x1xf32> to vector<3x256xf32>
    %56 = arith.addf %54, %55 : vector<3x256xf32>
    %57 = vector.shape_cast %56 : vector<3x256xf32> to vector<1x3x256xf32>
    %cst_29 = arith.constant dense<0.000000e+00> : vector<1xf32>
    %58 = vector.multi_reduction <add>, %57, %cst_29 [1, 2] : vector<1x3x256xf32> to vector<1xf32>
    %59 = vector.shape_cast %58 : vector<1xf32> to vector<1x1x1xf32>
    %60 = vector.extract %59[0, 0, 0] : f32 from vector<1x1x1xf32>
    %cst_30 = arith.constant 7.680000e+02 : f32
    %61 = arith.divf %60, %cst_30 : f32
    %62 = vector.broadcast %61 : f32 to vector<3x256xf32>
    %63 = arith.subf %56, %62 : vector<3x256xf32>
    %64 = arith.mulf %63, %63 : vector<3x256xf32>
    %65 = vector.shape_cast %64 : vector<3x256xf32> to vector<1x3x256xf32>
    %cst_31 = arith.constant dense<0.000000e+00> : vector<1xf32>
    %66 = vector.multi_reduction <add>, %65, %cst_31 [1, 2] : vector<1x3x256xf32> to vector<1xf32>
    %67 = vector.shape_cast %66 : vector<1xf32> to vector<1x1x1xf32>
    %68 = vector.extract %67[0, 0, 0] : f32 from vector<1x1x1xf32>
    %cst_32 = arith.constant 7.680000e+02 : f32
    %69 = arith.divf %68, %cst_32 : f32
    %cst_33 = arith.constant 9.99999974E-6 : f32
    %70 = arith.addf %69, %cst_33 : f32
    %71 = math.rsqrt %70 : f32
    %72 = vector.broadcast %71 : f32 to vector<3x256xf32>
    %73 = arith.mulf %63, %72 : vector<3x256xf32>
    %c0_34 = arith.constant 0 : index
    %c0_35 = arith.constant 0 : index
    %74 = vector.load %arg6[%c0_34, %c0_35] : memref<3x256xf32, #tpu.memory_space<vmem>>, vector<3x256xf32>
    %75 = arith.mulf %73, %74 : vector<3x256xf32>
    %c0_36 = arith.constant 0 : index
    %c0_37 = arith.constant 0 : index
    %76 = vector.load %arg7[%c0_36, %c0_37] : memref<3x256xf32, #tpu.memory_space<vmem>>, vector<3x256xf32>
    %77 = arith.addf %75, %76 : vector<3x256xf32>
    %78 = arith.negf %77 : vector<3x256xf32>
    %79 = math.exp %78 : vector<3x256xf32>
    %cst_38 = arith.constant 1.000000e+00 : f32
    %80 = vector.broadcast %cst_38 : f32 to vector<3x256xf32>
    %81 = arith.addf %80, %79 : vector<3x256xf32>
    %82 = arith.divf %80, %81 : vector<3x256xf32>
    %83 = arith.mulf %77, %82 : vector<3x256xf32>
    %c0_39 = arith.constant 0 : index
    %c0_40 = arith.constant 0 : index
    %84 = vector.load %arg8[%c0_39, %c0_40] : memref<6x27xf32, #tpu.memory_space<vmem>>, vector<6x27xf32>
    %c0_41 = arith.constant 0 : index
    %c0_42 = arith.constant 0 : index
    %85 = vector.load %arg9[%c0_41, %c0_42] : memref<6x1xf32, #tpu.memory_space<vmem>>, vector<6x1xf32>
    %c17_i32_43 = arith.constant 17 : i32
    %86 = tpu.dynamic_rotate %83 by %c17_i32_43 dim 1 : vector<3x256xf32>, i32 -> vector<3x256xf32>
    %c1_i32_44 = arith.constant 1 : i32
    %87 = tpu.dynamic_rotate %83 by %c1_i32_44 dim 1 : vector<3x256xf32>, i32 -> vector<3x256xf32>
    %88 = vector.shape_cast %2 : vector<1x256xi1> to vector<1x256xi1>
    %89 = vector.broadcast %88 : vector<1x256xi1> to vector<3x256xi1>
    %90 = arith.select %89, %87, %86 : vector<3x256xi1>, vector<3x256xf32>
    %c0_45 = arith.constant 0 : index
    %c0_46 = arith.constant 0 : index
    %91 = vector.load %arg11[%c0_45, %c0_46] : memref<27x256xf32, #tpu.memory_space<vmem>>, vector<3x256xf32>
    tpu.vector_store %arg11[%c0_45, %c0_46], %90 {strides = array<i32>} : memref<27x256xf32, #tpu.memory_space<vmem>>, vector<3x256xf32>,
    %c16_i32_47 = arith.constant 16 : i32
    %92 = tpu.dynamic_rotate %83 by %c16_i32_47 dim 1 : vector<3x256xf32>, i32 -> vector<3x256xf32>
    %c3_48 = arith.constant 3 : index
    %c0_49 = arith.constant 0 : index
    %93 = vector.load %arg11[%c3_48, %c0_49] : memref<27x256xf32, #tpu.memory_space<vmem>>, vector<3x256xf32>
    tpu.vector_store %arg11[%c3_48, %c0_49], %92 {strides = array<i32>} : memref<27x256xf32, #tpu.memory_space<vmem>>, vector<3x256xf32>,
    %c15_i32_50 = arith.constant 15 : i32
    %94 = tpu.dynamic_rotate %83 by %c15_i32_50 dim 1 : vector<3x256xf32>, i32 -> vector<3x256xf32>
    %c31_i32_51 = arith.constant 31 : i32
    %95 = tpu.dynamic_rotate %83 by %c31_i32_51 dim 1 : vector<3x256xf32>, i32 -> vector<3x256xf32>
    %96 = vector.shape_cast %4 : vector<1x256xi1> to vector<1x256xi1>
    %97 = vector.broadcast %96 : vector<1x256xi1> to vector<3x256xi1>
    %98 = arith.select %97, %95, %94 : vector<3x256xi1>, vector<3x256xf32>
    %c6_52 = arith.constant 6 : index
    %c0_53 = arith.constant 0 : index
    %99 = vector.load %arg11[%c6_52, %c0_53] : memref<27x256xf32, #tpu.memory_space<vmem>>, vector<3x256xf32>
    tpu.vector_store %arg11[%c6_52, %c0_53], %98 {strides = array<i32>} : memref<27x256xf32, #tpu.memory_space<vmem>>, vector<3x256xf32>,
    %c1_i32_54 = arith.constant 1 : i32
    %100 = tpu.dynamic_rotate %83 by %c1_i32_54 dim 1 : vector<3x256xf32>, i32 -> vector<3x256xf32>
    %c241_i32_55 = arith.constant 241 : i32
    %101 = tpu.dynamic_rotate %83 by %c241_i32_55 dim 1 : vector<3x256xf32>, i32 -> vector<3x256xf32>
    %102 = vector.shape_cast %2 : vector<1x256xi1> to vector<1x256xi1>
    %103 = vector.broadcast %102 : vector<1x256xi1> to vector<3x256xi1>
    %104 = arith.select %103, %101, %100 : vector<3x256xi1>, vector<3x256xf32>
    %c9_56 = arith.constant 9 : index
    %c0_57 = arith.constant 0 : index
    %105 = vector.load %arg11[%c9_56, %c0_57] : memref<27x256xf32, #tpu.memory_space<vmem>>, vector<3x256xf32>
    tpu.vector_store %arg11[%c9_56, %c0_57], %104 {strides = array<i32>} : memref<27x256xf32, #tpu.memory_space<vmem>>, vector<3x256xf32>,
    %c0_i32_58 = arith.constant 0 : i32
    %106 = tpu.dynamic_rotate %83 by %c0_i32_58 dim 1 : vector<3x256xf32>, i32 -> vector<3x256xf32>
    %c12_59 = arith.constant 12 : index
    %c0_60 = arith.constant 0 : index
    %107 = vector.load %arg11[%c12_59, %c0_60] : memref<27x256xf32, #tpu.memory_space<vmem>>, vector<3x256xf32>
    tpu.vector_store %arg11[%c12_59, %c0_60], %106 {strides = array<i32>} : memref<27x256xf32, #tpu.memory_space<vmem>>, vector<3x256xf32>,
    %c255_i32_61 = arith.constant 255 : i32
    %108 = tpu.dynamic_rotate %83 by %c255_i32_61 dim 1 : vector<3x256xf32>, i32 -> vector<3x256xf32>
    %c15_i32_62 = arith.constant 15 : i32
    %109 = tpu.dynamic_rotate %83 by %c15_i32_62 dim 1 : vector<3x256xf32>, i32 -> vector<3x256xf32>
    %110 = vector.shape_cast %4 : vector<1x256xi1> to vector<1x256xi1>
    %111 = vector.broadcast %110 : vector<1x256xi1> to vector<3x256xi1>
    %112 = arith.select %111, %109, %108 : vector<3x256xi1>, vector<3x256xf32>
    %c15_63 = arith.constant 15 : index
    %c0_64 = arith.constant 0 : index
    %113 = vector.load %arg11[%c15_63, %c0_64] : memref<27x256xf32, #tpu.memory_space<vmem>>, vector<3x256xf32>
    tpu.vector_store %arg11[%c15_63, %c0_64], %112 {strides = array<i32>} : memref<27x256xf32, #tpu.memory_space<vmem>>, vector<3x256xf32>,
    %c241_i32_65 = arith.constant 241 : i32
    %114 = tpu.dynamic_rotate %83 by %c241_i32_65 dim 1 : vector<3x256xf32>, i32 -> vector<3x256xf32>
    %c225_i32_66 = arith.constant 225 : i32
    %115 = tpu.dynamic_rotate %83 by %c225_i32_66 dim 1 : vector<3x256xf32>, i32 -> vector<3x256xf32>
    %116 = vector.shape_cast %2 : vector<1x256xi1> to vector<1x256xi1>
    %117 = vector.broadcast %116 : vector<1x256xi1> to vector<3x256xi1>
    %118 = arith.select %117, %115, %114 : vector<3x256xi1>, vector<3x256xf32>
    %c18_67 = arith.constant 18 : index
    %c0_68 = arith.constant 0 : index
    %119 = vector.load %arg11[%c18_67, %c0_68] : memref<27x256xf32, #tpu.memory_space<vmem>>, vector<3x256xf32>
    tpu.vector_store %arg11[%c18_67, %c0_68], %118 {strides = array<i32>} : memref<27x256xf32, #tpu.memory_space<vmem>>, vector<3x256xf32>,
    %c240_i32_69 = arith.constant 240 : i32
    %120 = tpu.dynamic_rotate %83 by %c240_i32_69 dim 1 : vector<3x256xf32>, i32 -> vector<3x256xf32>
    %c21_70 = arith.constant 21 : index
    %c0_71 = arith.constant 0 : index
    %121 = vector.load %arg11[%c21_70, %c0_71] : memref<27x256xf32, #tpu.memory_space<vmem>>, vector<3x256xf32>
    tpu.vector_store %arg11[%c21_70, %c0_71], %120 {strides = array<i32>} : memref<27x256xf32, #tpu.memory_space<vmem>>, vector<3x256xf32>,
    %c239_i32_72 = arith.constant 239 : i32
    %122 = tpu.dynamic_rotate %83 by %c239_i32_72 dim 1 : vector<3x256xf32>, i32 -> vector<3x256xf32>
    %c255_i32_73 = arith.constant 255 : i32
    %123 = tpu.dynamic_rotate %83 by %c255_i32_73 dim 1 : vector<3x256xf32>, i32 -> vector<3x256xf32>
    %124 = vector.shape_cast %4 : vector<1x256xi1> to vector<1x256xi1>
    %125 = vector.broadcast %124 : vector<1x256xi1> to vector<3x256xi1>
    %126 = arith.select %125, %123, %122 : vector<3x256xi1>, vector<3x256xf32>
    %c24_74 = arith.constant 24 : index
    %c0_75 = arith.constant 0 : index
    %127 = vector.load %arg11[%c24_74, %c0_75] : memref<27x256xf32, #tpu.memory_space<vmem>>, vector<3x256xf32>
    tpu.vector_store %arg11[%c24_74, %c0_75], %126 {strides = array<i32>} : memref<27x256xf32, #tpu.memory_space<vmem>>, vector<3x256xf32>,
    %c0_76 = arith.constant 0 : index
    %c0_77 = arith.constant 0 : index
    %128 = vector.load %arg11[%c0_76, %c0_77] : memref<27x256xf32, #tpu.memory_space<vmem>>, vector<27x256xf32>
    %cst_78 = arith.constant dense<0.000000e+00> : vector<6x256xf32>
    %129 = tpu.matmul %84, %128, %cst_78 {dimension_numbers = #tpu.dot_dimension_numbers<[1], [0], [0], [1], [0, 0, 1, 1], [], []>} : vector<6x27xf32>, vector<27x256xf32>, vector<6x256xf32> -> vector<6x256xf32>
    %130 = vector.broadcast %85 : vector<6x1xf32> to vector<6x256xf32>
    %131 = arith.addf %129, %130 : vector<6x256xf32>
    %c0_79 = arith.constant 0 : index
    %c0_80 = arith.constant 0 : index
    %c0_81 = arith.constant 0 : index
    %132 = vector.load %arg10[%c0_79, %c0_80, %c0_81] : memref<1x6x256xf32, #tpu.memory_space<vmem>>, vector<1x6x256xf32>
    %133 = vector.shape_cast %132 : vector<1x6x256xf32> to vector<6x256xf32>
    %134 = vector.shape_cast %131 : vector<6x256xf32> to vector<1x6x256xf32>
    tpu.vector_store %arg10[%c0_79, %c0_80, %c0_81], %134 {strides = array<i32>} : memref<1x6x256xf32, #tpu.memory_space<vmem>>, vector<1x6x256xf32>,
    return
  }
  func.func @transform_0(%arg0: i32) -> (i32, i32) {
    %c0_i32 = arith.constant 0 : i32
    %c0_i32_0 = arith.constant 0 : i32
    %c0_i32_1 = arith.constant 0 : i32
    return %c0_i32, %c0_i32_0 : i32, i32
  }
  func.func @transform_1(%arg0: i32) -> (i32, i32, i32) {
    %c0_i32 = arith.constant 0 : i32
    %c0_i32_0 = arith.constant 0 : i32
    %c0_i32_1 = arith.constant 0 : i32
    return %arg0, %c0_i32, %c0_i32_0 : i32, i32, i32
  }
  func.func @transform_2(%arg0: i32) -> (i32, i32) {
    %c0_i32 = arith.constant 0 : i32
    %c0_i32_0 = arith.constant 0 : i32
    %c0_i32_1 = arith.constant 0 : i32
    return %c0_i32, %c0_i32_0 : i32, i32
  }
  func.func @transform_3(%arg0: i32) -> (i32, i32) {
    %c0_i32 = arith.constant 0 : i32
    %c0_i32_0 = arith.constant 0 : i32
    %c0_i32_1 = arith.constant 0 : i32
    return %c0_i32, %c0_i32_0 : i32, i32
  }
  func.func @transform_4(%arg0: i32) -> (i32, i32) {
    %c0_i32 = arith.constant 0 : i32
    %c0_i32_0 = arith.constant 0 : i32
    %c0_i32_1 = arith.constant 0 : i32
    return %c0_i32, %c0_i32_0 : i32, i32
  }
  func.func @transform_5(%arg0: i32) -> (i32, i32) {
    %c0_i32 = arith.constant 0 : i32
    %c0_i32_0 = arith.constant 0 : i32
    %c0_i32_1 = arith.constant 0 : i32
    return %c0_i32, %c0_i32_0 : i32, i32
  }
  func.func @transform_6(%arg0: i32) -> (i32, i32) {
    %c0_i32 = arith.constant 0 : i32
    %c0_i32_0 = arith.constant 0 : i32
    %c0_i32_1 = arith.constant 0 : i32
    return %c0_i32, %c0_i32_0 : i32, i32
  }
  func.func @transform_7(%arg0: i32) -> (i32, i32) {
    %c0_i32 = arith.constant 0 : i32
    %c0_i32_0 = arith.constant 0 : i32
    %c0_i32_1 = arith.constant 0 : i32
    return %c0_i32, %c0_i32_0 : i32, i32
  }
  func.func @transform_8(%arg0: i32) -> (i32, i32) {
    %c0_i32 = arith.constant 0 : i32
    %c0_i32_0 = arith.constant 0 : i32
    %c0_i32_1 = arith.constant 0 : i32
    return %c0_i32, %c0_i32_0 : i32, i32
  }
  func.func @transform_9(%arg0: i32) -> (i32, i32, i32) {
    %c0_i32 = arith.constant 0 : i32
    %c0_i32_0 = arith.constant 0 : i32
    %c0_i32_1 = arith.constant 0 : i32
    return %arg0, %c0_i32, %c0_i32_0 : i32, i32, i32
  }
}

</mosaic_0001>

<llo_original>
// kernel: interp_conv_merge.1
$region0: #{interp_conv_merge.1}
  #allocation0 [shape = 'u32[]', space=smem, size = 0x4, offset = 0x4, fixed_abs, tag = 'smem constant byte address 0x4 - core index']
  #allocation1 [shape = 'u32[72,128]{1,0:T(1,128)}', space=vmem, size = 0x9000, scoped, tag = 'internal scratch']
  #allocation2 [shape = 'f32[27,256]{1,0:T(8,128)}', space=vmem, size = 0x8000, scoped, tag = 'scratch operand']
  %s0 = inlined_call_operand.vmem [shape: s32[1,256], index: 0, kind: input, shape index: {}]
  %s1 = inlined_call_operand.vmem [shape: f32[2,3,64], index: 1, kind: input, shape index: {}]
  %s2 = inlined_call_operand.vmem [shape: f32[64,256], index: 2, kind: input, shape index: {}]
  %s3 = inlined_call_operand.vmem [shape: f32[3,27], index: 3, kind: input, shape index: {}]
  %s4 = inlined_call_operand.vmem [shape: f32[3,1], index: 4, kind: input, shape index: {}]
  %s5 = inlined_call_operand.vmem [shape: f32[3,256], index: 5, kind: input, shape index: {}]
  %s6 = inlined_call_operand.vmem [shape: f32[3,256], index: 6, kind: input, shape index: {}]
  %s7 = inlined_call_operand.vmem [shape: f32[6,27], index: 7, kind: input, shape index: {}]
  %s8 = inlined_call_operand.vmem [shape: f32[6,1], index: 8, kind: input, shape index: {}]
  %s9 = inlined_call_operand.vmem [shape: f32[2,6,256], index: 9, kind: output, shape index: {}]
  %s10 = sld [smem:[#allocation0]]
  $region69: #{interp_conv_merge.1} parent=0
    _
  %s12 = ssub.s32 1, %s10
  %s13 = scalar_select 0, %s12, %s10
  loop: start=0, step=1, limit=4
  $region2: #{interp_conv_merge.1} parent=0 // loop_pre_header
    _
  $region3: #{interp_conv_merge.1} parent=0 // loop_header
    %s15 = sphi 0, %s19
    %p16 = scmp.ge.s32.totalorder %s15, 4
    %s23 = sphi 0, %s23
    %s25 = sphi 0, %s23
    %s26 = sphi 0, %s25
    %s40 = sphi 0, %s26
    %s46 = sphi 0, %s48
    %s49 = sphi 0, %s46
    %s50 = sphi 0, %s49
    %s66 = sphi 0, %s50
    %s70 = sphi 0, %s70
    %s72 = sphi 0, %s70
    %s73 = sphi 0, %s72
    %s87 = sphi 0, %s73
    %s91 = sphi 0, %s91
    %s93 = sphi 0, %s91
    %s94 = sphi 0, %s93
    %s108 = sphi 0, %s94
    %s112 = sphi 0, %s112
    %s114 = sphi 0, %s112
    %s115 = sphi 0, %s114
    %s129 = sphi 0, %s115
    %s133 = sphi 0, %s133
    %s135 = sphi 0, %s133
    %s136 = sphi 0, %s135
    %s150 = sphi 0, %s136
    %s154 = sphi 0, %s154
    %s156 = sphi 0, %s154
    %s157 = sphi 0, %s156
    %s171 = sphi 0, %s157
    %s175 = sphi 0, %s175
    %s177 = sphi 0, %s175
    %s178 = sphi 0, %s177
    %s192 = sphi 0, %s178
    %s196 = sphi 0, %s196
    %s198 = sphi 0, %s196
    %s199 = sphi 0, %s198
    %s213 = sphi 0, %s199
    %s219 = sphi 0, %s221
    %s222 = sphi 0, %s219
    %s223 = sphi 0, %s222
    %s239 = sphi 0, %s223
  $region4: #{interp_conv_merge.1} parent=0 // loop_header_branch
    %18 = sbr.rel (%p16) target = $region8
  $region5: #{interp_conv_merge.1} parent=0 // loop_body
    %s20 = ssub.s32 %s15, 1
    %s21 = ssub.s32 %s15, 2
    %s22 = sadd.s32 %s15, 1
    %s24 = sadd.s32 %s23, 1
    %p27 = scmp.eq.s32.totalorder %s15, 1
    %p28 = scmp.ne.s32.totalorder %s23, %s25
    %p29 = scmp.eq.s32.totalorder %s15, 0
    %p30 = por %p28, %p29
    %p31 = scmp.ne.s32.totalorder %s23, %s25
    %p32 = scmp.eq.s32.totalorder %s20, 1
    %p33 = por %p31, %p32
    %p34 = scmp.ne.s32.totalorder %s25, %s26
    %p35 = scmp.eq.s32.totalorder %s20, 0
    %p36 = por %p34, %p35
    %p37 = scmp.ne.s32.totalorder %s25, %s26
    %p38 = scmp.eq.s32.totalorder %s21, 1
    %p39 = por %p37, %p38
    %p41 = scmp.ne.s32.totalorder %s26, %s40
    %p42 = scmp.eq.s32.totalorder %s21, 0
    %p43 = por %p41, %p42
    %s44 = ssub.s32 %s15, %s22
    %p45 = scmp.eq.s32.totalorder %s44, 0
    %s47 = sadd.s32 %s46, 1
    %s48 = scalar_select %p45, %s46, %s47
    %p51 = pneg %p45
    %p52 = scmp.eq.s32.totalorder %s15, 1
    %p53 = por %p51, %p52
    %p54 = scmp.ne.s32.totalorder %s46, %s49
    %p55 = scmp.eq.s32.totalorder %s15, 0
    %p56 = por %p54, %p55
    %p57 = scmp.ne.s32.totalorder %s46, %s49
    %p58 = scmp.eq.s32.totalorder %s20, 1
    %p59 = por %p57, %p58
    %p60 = scmp.ne.s32.totalorder %s49, %s50
    %p61 = scmp.eq.s32.totalorder %s20, 0
    %p62 = por %p60, %p61
    %p63 = scmp.ne.s32.totalorder %s49, %s50
    %p64 = scmp.eq.s32.totalorder %s21, 1
    %p65 = por %p63, %p64
    %p67 = scmp.ne.s32.totalorder %s50, %s66
    %p68 = scmp.eq.s32.totalorder %s21, 0
    %p69 = por %p67, %p68
    %s71 = sadd.s32 %s70, 1
    %p74 = scmp.eq.s32.totalorder %s15, 1
    %p75 = scmp.ne.s32.totalorder %s70, %s72
    %p76 = scmp.eq.s32.totalorder %s15, 0
    %p77 = por %p75, %p76
    %p78 = scmp.ne.s32.totalorder %s70, %s72
    %p79 = scmp.eq.s32.totalorder %s20, 1
    %p80 = por %p78, %p79
    %p81 = scmp.ne.s32.totalorder %s72, %s73
    %p82 = scmp.eq.s32.totalorder %s20, 0
    %p83 = por %p81, %p82
    %p84 = scmp.ne.s32.totalorder %s72, %s73
    %p85 = scmp.eq.s32.totalorder %s21, 1
    %p86 = por %p84, %p85
    %p88 = scmp.ne.s32.totalorder %s73, %s87
    %p89 = scmp.eq.s32.totalorder %s21, 0
    %p90 = por %p88, %p89
    %s92 = sadd.s32 %s91, 1
    %p95 = scmp.eq.s32.totalorder %s15, 1
    %p96 = scmp.ne.s32.totalorder %s91, %s93
    %p97 = scmp.eq.s32.totalorder %s15, 0
    %p98 = por %p96, %p97
    %p99 = scmp.ne.s32.totalorder %s91, %s93
    %p100 = scmp.eq.s32.totalorder %s20, 1
    %p101 = por %p99, %p100
    %p102 = scmp.ne.s32.totalorder %s93, %s94
    %p103 = scmp.eq.s32.totalorder %s20, 0
    %p104 = por %p102, %p103
    %p105 = scmp.ne.s32.totalorder %s93, %s94
    %p106 = scmp.eq.s32.totalorder %s21, 1
    %p107 = por %p105, %p106
    %p109 = scmp.ne.s32.totalorder %s94, %s108
    %p110 = scmp.eq.s32.totalorder %s21, 0
    %p111 = por %p109, %p110
    %s113 = sadd.s32 %s112, 1
    %p116 = scmp.eq.s32.totalorder %s15, 1
    %p117 = scmp.ne.s32.totalorder %s112, %s114
    %p118 = scmp.eq.s32.totalorder %s15, 0
    %p119 = por %p117, %p118
    %p120 = scmp.ne.s32.totalorder %s112, %s114
    %p121 = scmp.eq.s32.totalorder %s20, 1
    %p122 = por %p120, %p121
    %p123 = scmp.ne.s32.totalorder %s114, %s115
    %p124 = scmp.eq.s32.totalorder %s20, 0
    %p125 = por %p123, %p124
    %p126 = scmp.ne.s32.totalorder %s114, %s115
    %p127 = scmp.eq.s32.totalorder %s21, 1
    %p128 = por %p126, %p127
    %p130 = scmp.ne.s32.totalorder %s115, %s129
    %p131 = scmp.eq.s32.totalorder %s21, 0
    %p132 = por %p130, %p131
    %s134 = sadd.s32 %s133, 1
    %p137 = scmp.eq.s32.totalorder %s15, 1
    %p138 = scmp.ne.s32.totalorder %s133, %s135
    %p139 = scmp.eq.s32.totalorder %s15, 0
    %p140 = por %p138, %p139
    %p141 = scmp.ne.s32.totalorder %s133, %s135
    %p142 = scmp.eq.s32.totalorder %s20, 1
    %p143 = por %p141, %p142
    %p144 = scmp.ne.s32.totalorder %s135, %s136
    %p145 = scmp.eq.s32.totalorder %s20, 0
    %p146 = por %p144, %p145
    %p147 = scmp.ne.s32.totalorder %s135, %s136
    %p148 = scmp.eq.s32.totalorder %s21, 1
    %p149 = por %p147, %p148
    %p151 = scmp.ne.s32.totalorder %s136, %s150
    %p152 = scmp.eq.s32.totalorder %s21, 0
    %p153 = por %p151, %p152
    %s155 = sadd.s32 %s154, 1
    %p158 = scmp.eq.s32.totalorder %s15, 1
    %p159 = scmp.ne.s32.totalorder %s154, %s156
    %p160 = scmp.eq.s32.totalorder %s15, 0
    %p161 = por %p159, %p160
    %p162 = scmp.ne.s32.totalorder %s154, %s156
    %p163 = scmp.eq.s32.totalorder %s20, 1
    %p164 = por %p162, %p163
    %p165 = scmp.ne.s32.totalorder %s156, %s157
    %p166 = scmp.eq.s32.totalorder %s20, 0
    %p167 = por %p165, %p166
    %p168 = scmp.ne.s32.totalorder %s156, %s157
    %p169 = scmp.eq.s32.totalorder %s21, 1
    %p170 = por %p168, %p169
    %p172 = scmp.ne.s32.totalorder %s157, %s171
    %p173 = scmp.eq.s32.totalorder %s21, 0
    %p174 = por %p172, %p173
    %s176 = sadd.s32 %s175, 1
    %p179 = scmp.eq.s32.totalorder %s15, 1
    %p180 = scmp.ne.s32.totalorder %s175, %s177
    %p181 = scmp.eq.s32.totalorder %s15, 0
    %p182 = por %p180, %p181
    %p183 = scmp.ne.s32.totalorder %s175, %s177
    %p184 = scmp.eq.s32.totalorder %s20, 1
    %p185 = por %p183, %p184
    %p186 = scmp.ne.s32.totalorder %s177, %s178
    %p187 = scmp.eq.s32.totalorder %s20, 0
    %p188 = por %p186, %p187
    %p189 = scmp.ne.s32.totalorder %s177, %s178
    %p190 = scmp.eq.s32.totalorder %s21, 1
    %p191 = por %p189, %p190
    %p193 = scmp.ne.s32.totalorder %s178, %s192
    %p194 = scmp.eq.s32.totalorder %s21, 0
    %p195 = por %p193, %p194
    %s197 = sadd.s32 %s196, 1
    %p200 = scmp.eq.s32.totalorder %s15, 1
    %p201 = scmp.ne.s32.totalorder %s196, %s198
    %p202 = scmp.eq.s32.totalorder %s15, 0
    %p203 = por %p201, %p202
    %p204 = scmp.ne.s32.totalorder %s196, %s198
    %p205 = scmp.eq.s32.totalorder %s20, 1
    %p206 = por %p204, %p205
    %p207 = scmp.ne.s32.totalorder %s198, %s199
    %p208 = scmp.eq.s32.totalorder %s20, 0
    %p209 = por %p207, %p208
    %p210 = scmp.ne.s32.totalorder %s198, %s199
    %p211 = scmp.eq.s32.totalorder %s21, 1
    %p212 = por %p210, %p211
    %p214 = scmp.ne.s32.totalorder %s199, %s213
    %p215 = scmp.eq.s32.totalorder %s21, 0
    %p216 = por %p214, %p215
    %s217 = ssub.s32 %s15, %s22
    %p218 = scmp.eq.s32.totalorder %s217, 0
    %s220 = sadd.s32 %s219, 1
    %s221 = scalar_select %p218, %s219, %s220
    %p224 = pneg %p218
    %p225 = scmp.eq.s32.totalorder %s15, 1
    %p226 = por %p224, %p225
    %p227 = scmp.ne.s32.totalorder %s219, %s222
    %p228 = scmp.eq.s32.totalorder %s15, 0
    %p229 = por %p227, %p228
    %p230 = scmp.ne.s32.totalorder %s219, %s222
    %p231 = scmp.eq.s32.totalorder %s20, 1
    %p232 = por %p230, %p231
    %p233 = scmp.ne.s32.totalorder %s222, %s223
    %p234 = scmp.eq.s32.totalorder %s20, 0
    %p235 = por %p233, %p234
    %p236 = scmp.ne.s32.totalorder %s222, %s223
    %p237 = scmp.eq.s32.totalorder %s21, 1
    %p238 = por %p236, %p237
    %p240 = scmp.ne.s32.totalorder %s223, %s239
    %p241 = scmp.eq.s32.totalorder %s21, 0
    %p242 = por %p240, %p241
    %p243 = scmp.le.s32.totalorder 1, %s15
    %p244 = scmp.lt.s32.totalorder %s15, 3
    %p245 = pnand %p243, %p244
    %p246 = pneg %p245
    // Predicated region
    $region9: #{interp_conv_merge.1} parent=5 // pred_check
      _
    $region10: #{interp_conv_merge.1} parent=5 // pred_check_branch
      %248 = sbr.rel (%p245) target = $region12
    $region11: #{interp_conv_merge.1} parent=5 // pred_region
      %s249 = ssub.s32 %s15, 1
      // Predicated region
      $region13: #{interp_conv_merge.1} parent=11 // pred_check
        %p250 = pneg %p36
      $region14: #{interp_conv_merge.1} parent=11 // pred_check_branch
        %252 = sbr.rel (%p250) target = $region16
      $region15: #{interp_conv_merge.1} parent=11 // pred_region
        _
      $region16: #{interp_conv_merge.1} parent=11 // pred_fallthru
        _
      // Predicated region
      $region17: #{interp_conv_merge.1} parent=11 // pred_check
        %p253 = pneg %p83
      $region18: #{interp_conv_merge.1} parent=11 // pred_check_branch
        %255 = sbr.rel (%p253) target = $region20
      $region19: #{interp_conv_merge.1} parent=11 // pred_region
        _
      $region20: #{interp_conv_merge.1} parent=11 // pred_fallthru
        _
      // Predicated region
      $region21: #{interp_conv_merge.1} parent=11 // pred_check
        %p256 = pneg %p104
      $region22: #{interp_conv_merge.1} parent=11 // pred_check_branch
        %258 = sbr.rel (%p256) target = $region24
      $region23: #{interp_conv_merge.1} parent=11 // pred_region
        _
      $region24: #{interp_conv_merge.1} parent=11 // pred_fallthru
        _
      // Predicated region
      $region25: #{interp_conv_merge.1} parent=11 // pred_check
        %p259 = pneg %p125
      $region26: #{interp_conv_merge.1} parent=11 // pred_check_branch
        %261 = sbr.rel (%p259) target = $region28
      $region27: #{interp_conv_merge.1} parent=11 // pred_region
        _
      $region28: #{interp_conv_merge.1} parent=11 // pred_fallthru
        _
      // Predicated region
      $region29: #{interp_conv_merge.1} parent=11 // pred_check
        %p262 = pneg %p146
      $region30: #{interp_conv_merge.1} parent=11 // pred_check_branch
        %264 = sbr.rel (%p262) target = $region32
      $region31: #{interp_conv_merge.1} parent=11 // pred_region
        _
      $region32: #{interp_conv_merge.1} parent=11 // pred_fallthru
        _
      // Predicated region
      $region33: #{interp_conv_merge.1} parent=11 // pred_check
        %p265 = pneg %p167
      $region34: #{interp_conv_merge.1} parent=11 // pred_check_branch
        %267 = sbr.rel (%p265) target = $region36
      $region35: #{interp_conv_merge.1} parent=11 // pred_region
        _
      $region36: #{interp_conv_merge.1} parent=11 // pred_fallthru
        _
      // Predicated region
      $region37: #{interp_conv_merge.1} parent=11 // pred_check
        %p268 = pneg %p188
      $region38: #{interp_conv_merge.1} parent=11 // pred_check_branch
        %270 = sbr.rel (%p268) target = $region40
      $region39: #{interp_conv_merge.1} parent=11 // pred_region
        _
      $region40: #{interp_conv_merge.1} parent=11 // pred_fallthru
        _
      // Predicated region
      $region41: #{interp_conv_merge.1} parent=11 // pred_check
        %p271 = pneg %p209
      $region42: #{interp_conv_merge.1} parent=11 // pred_check_branch
        %273 = sbr.rel (%p271) target = $region44
      $region43: #{interp_conv_merge.1} parent=11 // pred_region
        _
      $region44: #{interp_conv_merge.1} parent=11 // pred_fallthru
        _
    $region12: #{interp_conv_merge.1} parent=5 // pred_fallthru
      _
    %p274 = scmp.lt.s32.totalorder %s15, 2
    // Predicated region
    $region45: #{interp_conv_merge.1} parent=5 // pred_check
      %p275 = pneg %p274
    $region46: #{interp_conv_merge.1} parent=5 // pred_check_branch
      %277 = sbr.rel (%p275) target = $region48
    $region47: #{interp_conv_merge.1} parent=5 // pred_region
      // Predicated region
      $region49: #{interp_conv_merge.1} parent=47 // pred_check
        %p278 = pneg %p56
      $region50: #{interp_conv_merge.1} parent=47 // pred_check_branch
        %280 = sbr.rel (%p278) target = $region52
      $region51: #{interp_conv_merge.1} parent=47 // pred_region
        %p281 = scmp.lt.s32.totalorder %s15, 1
        %s282 = scalar_select %p281, %s15, 1
        %s283 = smul.addr %s282, 4
        %s284 = scalar_lea.vmem %s1, %s283
      $region52: #{interp_conv_merge.1} parent=47 // pred_fallthru
        _
    $region48: #{interp_conv_merge.1} parent=5 // pred_fallthru
      _
    %p285 = scmp.le.s32.totalorder 1, %s15
    %p286 = scmp.lt.s32.totalorder %s15, 3
    %p287 = pnand %p285, %p286
    %p288 = pneg %p287
    // Predicated region
    $region53: #{interp_conv_merge.1} parent=5 // pred_check
      _
    $region54: #{interp_conv_merge.1} parent=5 // pred_check_branch
      %290 = sbr.rel (%p287) target = $region56
    $region55: #{interp_conv_merge.1} parent=5 // pred_region
      %s291 = ssub.s32 %s15, 1
      %p292 = pneg %p36
      %p293 = pneg %p33
      %p294 = scmp.lt.s32.totalorder %s20, 1
      %s295 = scalar_select %p294, %s20, 1
      %s296 = smul.addr %s295, 4
      %s297 = scalar_lea.vmem %s1, %s296
      %p298 = pneg %p62
      %p299 = pneg %p59
      %p300 = pneg %p83
      %p301 = pneg %p80
      %p302 = pneg %p104
      %p303 = pneg %p101
      %p304 = pneg %p125
      %p305 = pneg %p122
      %p306 = pneg %p146
      %p307 = pneg %p143
      %p308 = pneg %p167
      %p309 = pneg %p164
      %p310 = pneg %p188
      %p311 = pneg %p185
      %p312 = pneg %p209
      %p313 = pneg %p206
      %p314 = pneg %p235
      %p315 = pneg %p232
      %p316 = scmp.lt.s32.totalorder %s20, 1
      %s317 = scalar_select %p316, %s20, 1
      %s318 = smul.addr %s317, 2
      %s319 = smul.addr %s318, 8
      %s320 = scalar_lea.vmem %s9, %s319
      %p321 = scmp.lt.s32.totalorder %s20, 1
      %s322 = scalar_select %p321, %s20, 1
      %s323 = smul.addr %s322, 4
      %s324 = scalar_lea.vmem %s1, %s323
      %p325 = scmp.lt.s32.totalorder %s20, 1
      %s326 = scalar_select %p325, %s20, 1
      %s327 = smul.addr %s326, 2
      %s328 = smul.addr %s327, 8
      %s329 = scalar_lea.vmem %s9, %s328
      %v330 = vld [vmem:[%s0] sm:$0x3]
      %vm331 = vcmp.lt.s32.totalorder %v330, 1
      %vm332 = vcmp.ge.s32.totalorder %v330, 15
      %v333 = vld [vmem:[%s324] sm:$0x7]
      %v334 = vld [vmem:[%s2] sm:$0xff]
      %v335 = vld [vmem:[%s2 + $0x8] sm:$0xff]
      %v336 = vld [vmem:[%s2 + $0x10] sm:$0xff]
      %v337 = vld [vmem:[%s2 + $0x18] sm:$0xff]
      %v338 = vld [vmem:[%s2 + $0x20] sm:$0xff]
      %v339 = vld [vmem:[%s2 + $0x28] sm:$0xff]
      %v340 = vld [vmem:[%s2 + $0x30] sm:$0xff]
      %v341 = vld [vmem:[%s2 + $0x38] sm:$0xff]
      %v342 = vld [vmem:[%s2 + $0x40] sm:$0xff]
      %v343 = vld [vmem:[%s2 + $0x48] sm:$0xff]
      %v344 = vld [vmem:[%s2 + $0x50] sm:$0xff]
      %v345 = vld [vmem:[%s2 + $0x58] sm:$0xff]
      %v346 = vld [vmem:[%s2 + $0x60] sm:$0xff]
      %v347 = vld [vmem:[%s2 + $0x68] sm:$0xff]
      %v348 = vld [vmem:[%s2 + $0x70] sm:$0xff]
      %v349 = vld [vmem:[%s2 + $0x78] sm:$0xff]
      %vm350 = vcmask 523264
      %v352 = vsel %vm350, %v333, 0
      %354 = vmatpush.msra.mxu0 0.0
      %355 = vmatpush.msra.mxu0 0.0
      %356 = vmatpush.msra.mxu0 0.0
      %357 = vmatpush.msra.mxu0 0.0
      %358 = vmatpush.msra.mxu0 0.0
      %359 = vmatpush.msra.mxu0 0.0
      %360 = vmatpush.msra.mxu0 0.0
      %361 = vmatpush.msra.mxu0 0.0
      %362 = vmatpush.msra.mxu0 %v348
      %363 = vmatpush.msra.mxu0 %v346
      %364 = vmatpush.msra.mxu0 %v344
      %365 = vmatpush.msra.mxu0 %v342
      %366 = vmatpush.msra.mxu0 %v340
      %367 = vmatpush.msra.mxu0 %v338
      %368 = vmatpush.msra.mxu0 %v336
      %369 = vmatpush.msra.mxu0 %v334
      %370 = vmatmul.f32.gmra.mxu0 %v352
      %v371 = vpop.f32.mrf.mxu0
      %v372 = vadd.f32 0.0, %v371
      %373 = vdwg.mxu0
      %374 = vmatpush.msra.mxu0 0.0
      %375 = vmatpush.msra.mxu0 0.0
      %376 = vmatpush.msra.mxu0 0.0
      %377 = vmatpush.msra.mxu0 0.0
      %378 = vmatpush.msra.mxu0 0.0
      %379 = vmatpush.msra.mxu0 0.0
      %380 = vmatpush.msra.mxu0 0.0
      %381 = vmatpush.msra.mxu0 0.0
      %382 = vmatpush.msra.mxu0 %v349
      %383 = vmatpush.msra.mxu0 %v347
      %384 = vmatpush.msra.mxu0 %v345
      %385 = vmatpush.msra.mxu0 %v343
      %386 = vmatpush.msra.mxu0 %v341
      %387 = vmatpush.msra.mxu0 %v339
      %388 = vmatpush.msra.mxu0 %v337
      %389 = vmatpush.msra.mxu0 %v335
      %390 = vmatmul.f32.gmra.mxu0 %v352
      %v391 = vpop.f32.mrf.mxu0
      %v392 = vadd.f32 0.0, %v391
      %393 = vdwg.mxu0
      %v394 = vld [vmem:[%s3] sm:$0x7]
      %v395 = vld [vmem:[%s4] sm:$0x7]
      %396 = vrot.lane.b32.xlu0 %v372, 17
      %v397 = vpop.permute.xlu0 %396
      %398 = vrot.lane.b32.xlu0 %v392, 17
      %v399 = vpop.permute.xlu0 %398
      %v400 = vlaneseq
      %v401 = vand.u32 %v400, 127
      %vm402 = vcmp.lt.s32.totalorder %v401, 17
      %v403 = vsel %vm402, %v397, %v399
      %v404 = vsel %vm402, %v399, %v397
      %405 = vrot.lane.b32.xlu0 %v372, 1
      %v406 = vpop.permute.xlu0 %405
      %407 = vrot.lane.b32.xlu0 %v392, 1
      %v408 = vpop.permute.xlu0 %407
      %vm409 = vcmp.lt.s32.totalorder %v401, 1
      %v410 = vsel %vm409, %v406, %v408
      %v411 = vsel %vm409, %v408, %v406
      %v412 = vsel %vm331, 1, 0
      %v413 = vperm.slane %v412, 0
      %v414 = vperm.slane %v412, 1
      %vm415 = vcmp.eq.s32.totalorder %v413, 1
      %vm416 = vcmp.eq.s32.totalorder %v414, 1
      %v417 = vsel %vm415, %v411, %v404
      %v418 = vsel %vm416, %v410, %v403
      %419 = vst [vmem:[#allocation2] sm:$0x7] %v417
      %420 = vst [vmem:[#allocation2 + $0x8] sm:$0x7] %v418
      %421 = vrot.lane.b32.xlu0 %v372, 16
      %v422 = vpop.permute.xlu0 %421
      %423 = vrot.lane.b32.xlu0 %v392, 16
      %v424 = vpop.permute.xlu0 %423
      %vm425 = vcmp.lt.s32.totalorder %v401, 16
      %v426 = vsel %vm425, %v422, %v424
      %v427 = vsel %vm425, %v424, %v422
      %v430 = vrot.slane %v427, 5
      %v431 = vrot.slane %v426, 5
      %434 = vst [vmem:[#allocation2] sm:$0x38] %v430
      %435 = vst [vmem:[#allocation2 + $0x8] sm:$0x38] %v431
      %436 = vrot.lane.b32.xlu0 %v372, 15
      %v437 = vpop.permute.xlu0 %436
      %438 = vrot.lane.b32.xlu0 %v392, 15
      %v439 = vpop.permute.xlu0 %438
      %vm440 = vcmp.lt.s32.totalorder %v401, 15
      %v441 = vsel %vm440, %v437, %v439
      %v442 = vsel %vm440, %v439, %v437
      %443 = vrot.lane.b32.xlu0 %v372, 31
      %v444 = vpop.permute.xlu0 %443
      %445 = vrot.lane.b32.xlu0 %v392, 31
      %v446 = vpop.permute.xlu0 %445
      %vm447 = vcmp.lt.s32.totalorder %v401, 31
      %v448 = vsel %vm447, %v444, %v446
      %v449 = vsel %vm447, %v446, %v444
      %v450 = vsel %vm332, 1, 0
      %v451 = vperm.slane %v450, 0
      %v452 = vperm.slane %v450, 1
      %vm453 = vcmp.eq.s32.totalorder %v451, 1
      %vm454 = vcmp.eq.s32.totalorder %v452, 1
      %v455 = vsel %vm453, %v449, %v442
      %v456 = vsel %vm454, %v448, %v441
      %v459 = vrot.slane %v455, 2
      %v460 = vrot.slane %v456, 2
      %463 = vst [vmem:[#allocation2] sm:$0xc0] %v459
      %464 = vst [vmem:[#allocation2 + $0x8] sm:$0xc0] %v460
      %465 = vst [vmem:[#allocation2 + $0x10] sm:$0x1] %v459
      %466 = vst [vmem:[#allocation2 + $0x18] sm:$0x1] %v460
      %467 = vrot.lane.b32.xlu0 %v372, 113
      %v468 = vpop.permute.xlu0 %467
      %469 = vrot.lane.b32.xlu0 %v392, 113
      %v470 = vpop.permute.xlu0 %469
      %vm471 = vcmp.lt.s32.totalorder %v401, 113
      %v472 = vsel %vm471, %v468, %v470
      %v473 = vsel %vm471, %v470, %v468
      %v474 = vsel %vm415, %v472, %v411
      %v475 = vsel %vm416, %v473, %v410
      %v478 = vrot.slane %v474, 7
      %v479 = vrot.slane %v475, 7
      %482 = vst [vmem:[#allocation2 + $0x10] sm:$0xe] %v478
      %483 = vst [vmem:[#allocation2 + $0x18] sm:$0xe] %v479
      %v486 = vrot.slane %v372, 4
      %v487 = vrot.slane %v392, 4
      %490 = vst [vmem:[#allocation2 + $0x10] sm:$0x70] %v486
      %491 = vst [vmem:[#allocation2 + $0x18] sm:$0x70] %v487
      %492 = vrot.lane.b32.xlu0 %v372, 127
      %v493 = vpop.permute.xlu0 %492
      %494 = vrot.lane.b32.xlu0 %v392, 127
      %v495 = vpop.permute.xlu0 %494
      %vm496 = vcmp.lt.s32.totalorder %v401, 127
      %v497 = vsel %vm496, %v493, %v495
      %v498 = vsel %vm496, %v495, %v493
      %v499 = vsel %vm453, %v442, %v497
      %v500 = vsel %vm454, %v441, %v498
      %v503 = vrot.slane %v499, 1
      %v504 = vrot.slane %v500, 1
      %507 = vst [vmem:[#allocation2 + $0x10] sm:$0x80] %v503
      %508 = vst [vmem:[#allocation2 + $0x18] sm:$0x80] %v504
      %509 = vst [vmem:[#allocation2 + $0x20] sm:$0x3] %v503
      %510 = vst [vmem:[#allocation2 + $0x28] sm:$0x3] %v504
      %511 = vrot.lane.b32.xlu0 %v372, 97
      %v512 = vpop.permute.xlu0 %511
      %513 = vrot.lane.b32.xlu0 %v392, 97
      %v514 = vpop.permute.xlu0 %513
      %vm515 = vcmp.lt.s32.totalorder %v401, 97
      %v516 = vsel %vm515, %v512, %v514
      %v517 = vsel %vm515, %v514, %v512
      %v518 = vsel %vm415, %v516, %v472
      %v519 = vsel %vm416, %v517, %v473
      %v522 = vrot.slane %v518, 6
      %v523 = vrot.slane %v519, 6
      %526 = vst [vmem:[#allocation2 + $0x20] sm:$0x1c] %v522
      %527 = vst [vmem:[#allocation2 + $0x28] sm:$0x1c] %v523
      %528 = vrot.lane.b32.xlu0 %v372, 112
      %v529 = vpop.permute.xlu0 %528
      %530 = vrot.lane.b32.xlu0 %v392, 112
      %v531 = vpop.permute.xlu0 %530
      %vm532 = vcmp.lt.s32.totalorder %v401, 112
      %v533 = vsel %vm532, %v529, %v531
      %v534 = vsel %vm532, %v531, %v529
      %v537 = vrot.slane %v533, 3
      %v538 = vrot.slane %v534, 3
      %541 = vst [vmem:[#allocation2 + $0x20] sm:$0xe0] %v537
      %542 = vst [vmem:[#allocation2 + $0x28] sm:$0xe0] %v538
      %543 = vrot.lane.b32.xlu0 %v372, 111
      %v544 = vpop.permute.xlu0 %543
      %545 = vrot.lane.b32.xlu0 %v392, 111
      %v546 = vpop.permute.xlu0 %545
      %vm547 = vcmp.lt.s32.totalorder %v401, 111
      %v548 = vsel %vm547, %v544, %v546
      %v549 = vsel %vm547, %v546, %v544
      %v550 = vsel %vm453, %v497, %v548
      %v551 = vsel %vm454, %v498, %v549
      %552 = vst [vmem:[#allocation2 + $0x30] sm:$0x7] %v550
      %553 = vst [vmem:[#allocation2 + $0x38] sm:$0x7] %v551
      %v554 = vld [vmem:[#allocation2] sm:$0xff]
      %v555 = vld [vmem:[#allocation2 + $0x8] sm:$0xff]
      %v556 = vld [vmem:[#allocation2 + $0x10] sm:$0xff]
      %v557 = vld [vmem:[#allocation2 + $0x18] sm:$0xff]
      %v558 = vld [vmem:[#allocation2 + $0x20] sm:$0xff]
      %v559 = vld [vmem:[#allocation2 + $0x28] sm:$0xff]
      %v560 = vld [vmem:[#allocation2 + $0x30] sm:$0x7]
      %v561 = vld [vmem:[#allocation2 + $0x38] sm:$0x7]
      %563 = vset.pattern.permute.xlu0 0
      %564 = vperm.xlu0 %563, %v395
      %v565 = vpop.permute.xlu0 %564
      %vm567 = vcmask 220160
      %v569 = vsel %vm567, %v394, 0
      %vm571 = vcmask 1042432
      %v573 = vsel %vm571, %v560, 0
      %v576 = vsel %vm571, %v561, 0
      %578 = vmatpush.msra.mxu0 0.0
      %579 = vmatpush.msra.mxu0 0.0
      %580 = vmatpush.msra.mxu0 0.0
      %581 = vmatpush.msra.mxu0 0.0
      %582 = vmatpush.msra.mxu0 0.0
      %583 = vmatpush.msra.mxu0 0.0
      %584 = vmatpush.msra.mxu0 0.0
      %585 = vmatpush.msra.mxu0 0.0
      %586 = vmatpush.msra.mxu0 0.0
      %587 = vmatpush.msra.mxu0 0.0
      %588 = vmatpush.msra.mxu0 0.0
      %589 = vmatpush.msra.mxu0 0.0
      %590 = vmatpush.msra.mxu0 %v573
      %591 = vmatpush.msra.mxu0 %v558
      %592 = vmatpush.msra.mxu0 %v556
      %593 = vmatpush.msra.mxu0 %v554
      %594 = vmatmul.f32.gmra.mxu0 %v569
      %v595 = vpop.f32.mrf.mxu0
      %v596 = vadd.f32 %v565, %v595
      %597 = vdwg.mxu0
      %598 = vmatpush.msra.mxu0 0.0
      %599 = vmatpush.msra.mxu0 0.0
      %600 = vmatpush.msra.mxu0 0.0
      %601 = vmatpush.msra.mxu0 0.0
      %602 = vmatpush.msra.mxu0 0.0
      %603 = vmatpush.msra.mxu0 0.0
      %604 = vmatpush.msra.mxu0 0.0
      %605 = vmatpush.msra.mxu0 0.0
      %606 = vmatpush.msra.mxu0 0.0
      %607 = vmatpush.msra.mxu0 0.0
      %608 = vmatpush.msra.mxu0 0.0
      %609 = vmatpush.msra.mxu0 0.0
      %610 = vmatpush.msra.mxu0 %v576
      %611 = vmatpush.msra.mxu0 %v559
      %612 = vmatpush.msra.mxu0 %v557
      %613 = vmatpush.msra.mxu0 %v555
      %614 = vmatmul.f32.gmra.mxu0 %v569
      %v615 = vpop.f32.mrf.mxu0
      %v616 = vadd.f32 %v565, %v615
      %617 = vdwg.mxu0
      %v618 = vsel %vm571, %v596, 0.0
      %v619 = vsel %vm571, %v616, 0.0
      %v620 = vadd.f32 %v618, %v619
      %621 = vadd.xlane.f32.xlu0 %v620
      %v622 = vpop.xlane.xlu0 %621
      %v623 = vrot.slane %v622, 4
      %v624 = vadd.f32 %v622, %v623
      %v625 = vrot.slane %v624, 2
      %v626 = vadd.f32 %v624, %v625
      %v627 = vrot.slane %v626, 1
      %v628 = vadd.f32 %v626, %v627
      %s629 = vtos %v628
      %v630 = vrcp.pop 768.0
      %v631 = vmul.f32 768.0, %v630
      %v632 = vsub.f32 1.0, %v631
      %v633 = vmul.f32 %v630, %v632
      %v634 = vadd.f32 %v630, %v633
      %vm635 = vweird.f32 %v630
      %v636 = vsel %vm635, %v630, %v634
      %s637 = vtos %v636
      %s638 = smul.f32 %s629, %s637
      %v639 = vstv %s638
      %v640 = vsub.f32 %v596, %v639
      %v641 = vsub.f32 %v616, %v639
      %v642 = vmul.f32 %v640, %v640
      %v643 = vmul.f32 %v641, %v641
      %v644 = vsel %vm571, %v642, 0.0
      %v645 = vsel %vm571, %v643, 0.0
      %v646 = vadd.f32 %v644, %v645
      %647 = vadd.xlane.f32.xlu0 %v646
      %v648 = vpop.xlane.xlu0 %647
      %v649 = vrot.slane %v648, 4
      %v650 = vadd.f32 %v648, %v649
      %v651 = vrot.slane %v650, 2
      %v652 = vadd.f32 %v650, %v651
      %v653 = vrot.slane %v652, 1
      %v654 = vadd.f32 %v652, %v653
      %s655 = vtos %v654
      %v656 = vrcp.pop 768.0
      %v657 = vmul.f32 768.0, %v656
      %v658 = vsub.f32 1.0, %v657
      %v659 = vmul.f32 %v656, %v658
      %v660 = vadd.f32 %v656, %v659
      %vm661 = vweird.f32 %v656
      %v662 = vsel %vm661, %v656, %v660
      %s663 = vtos %v662
      %s664 = smul.f32 %s655, %s663
      %s665 = sadd.f32 %s664, 1e-05
      %v666 = vstv %s665
      %v667 = vrsqrt.pop %v666
      %v668 = vmul.f32 %v667, %v666
      %v669 = vmul.f32 %v668, %v667
      %v670 = vmul.f32 0.5, %v669
      %v671 = vsub.f32 1.5, %v670
      %v672 = vmul.f32 %v667, %v671
      %vm673 = vweird.f32 %v666
      %vm674 = vweird.f32 %v667
      %vm675 = vmor %vm673, %vm674
      %v676 = vsel %vm675, %v667, %v672
      %s677 = vtos %v676
      %v678 = vstv %s677
      %v679 = vmul.f32 %v640, %v678
      %v680 = vmul.f32 %v641, %v678
      %v681 = vld [vmem:[%s5] sm:$0x77]
      %683 = vst [vmem:[#allocation1] ss:$2 sm:$0xff] %v681
      %v684 = vld.sshfl [vmem:[#allocation1] sm:$0xff pattern:$0x75316420]
      %v685 = vld.sshfl [vmem:[#allocation1 + $0x8] sm:$0xff pattern:$0x75316420]
      %v688 = vmul.f32 %v679, %v684
      %v689 = vmul.f32 %v680, %v685
      %v690 = vld [vmem:[%s6] sm:$0x77]
      %692 = vst [vmem:[#allocation1] ss:$2 sm:$0xff] %v690
      %v693 = vld.sshfl [vmem:[#allocation1] sm:$0xff pattern:$0x75316420]
      %v694 = vld.sshfl [vmem:[#allocation1 + $0x8] sm:$0xff pattern:$0x75316420]
      %v697 = vadd.f32 %v688, %v693
      %v698 = vadd.f32 %v689, %v694
      %v699 = vxor.u32 %v697, 2147483648
      %v700 = vxor.u32 %v698, 2147483648
      %v701 = vmul.f32 %v699, 1.442695
      %v702 = vpow.pop %v701
      %v703 = vmul.f32 %v700, 1.442695
      %v704 = vpow.pop %v703
      %v705 = vadd.f32 %v702, 1.0
      %v706 = vadd.f32 %v704, 1.0
      %v707 = vrcp.pop %v705
      %v708 = vmul.f32 %v705, %v707
      %v709 = vsub.f32 1.0, %v708
      %v710 = vmul.f32 %v707, %v709
      %v711 = vadd.f32 %v707, %v710
      %vm712 = vweird.f32 %v705
      %vm713 = vweird.f32 %v707
      %vm714 = vmor %vm712, %vm713
      %v715 = vsel %vm714, %v707, %v711
      %v716 = vand.u32 2147483647, %v705
      %vm717 = vcmp.eq.f32.partialorder %v716, 8.507059e+37
      %v718 = vand.u32 %v705, 2147483648
      %v719 = vor.u32 1.1754944e-38, %v718
      %v720 = vsel %vm717, %v719, %v715
      %v721 = vmul.f32 1.0, %v720
      %v722 = vrcp.pop %v706
      %v723 = vmul.f32 %v706, %v722
      %v724 = vsub.f32 1.0, %v723
      %v725 = vmul.f32 %v722, %v724
      %v726 = vadd.f32 %v722, %v725
      %vm727 = vweird.f32 %v706
      %vm728 = vweird.f32 %v722
      %vm729 = vmor %vm727, %vm728
      %v730 = vsel %vm729, %v722, %v726
      %v731 = vand.u32 2147483647, %v706
      %vm732 = vcmp.eq.f32.partialorder %v731, 8.507059e+37
      %v733 = vand.u32 %v706, 2147483648
      %v734 = vor.u32 1.1754944e-38, %v733
      %v735 = vsel %vm732, %v734, %v730
      %v736 = vmul.f32 1.0, %v735
      %v737 = vmul.f32 %v697, %v721
      %v738 = vmul.f32 %v698, %v736
      %v739 = vld [vmem:[%s7] sm:$0x3f]
      %v740 = vld [vmem:[%s8] sm:$0x3f]
      %741 = vrot.lane.b32.xlu0 %v737, 17
      %v742 = vpop.permute.xlu0 %741
      %743 = vrot.lane.b32.xlu0 %v738, 17
      %v744 = vpop.permute.xlu0 %743
      %v745 = vsel %vm402, %v742, %v744
      %v746 = vsel %vm402, %v744, %v742
      %747 = vrot.lane.b32.xlu0 %v737, 1
      %v748 = vpop.permute.xlu0 %747
      %749 = vrot.lane.b32.xlu0 %v738, 1
      %v750 = vpop.permute.xlu0 %749
      %v751 = vsel %vm409, %v748, %v750
      %v752 = vsel %vm409, %v750, %v748
      %v753 = vsel %vm415, %v752, %v746
      %v754 = vsel %vm416, %v751, %v745
      %755 = vst [vmem:[#allocation2] sm:$0x7] %v753
      %756 = vst [vmem:[#allocation2 + $0x8] sm:$0x7] %v754
      %757 = vrot.lane.b32.xlu0 %v737, 16
      %v758 = vpop.permute.xlu0 %757
      %759 = vrot.lane.b32.xlu0 %v738, 16
      %v760 = vpop.permute.xlu0 %759
      %v761 = vsel %vm425, %v758, %v760
      %v762 = vsel %vm425, %v760, %v758
      %v765 = vrot.slane %v762, 5
      %v766 = vrot.slane %v761, 5
      %769 = vst [vmem:[#allocation2] sm:$0x38] %v765
      %770 = vst [vmem:[#allocation2 + $0x8] sm:$0x38] %v766
      %771 = vrot.lane.b32.xlu0 %v737, 15
      %v772 = vpop.permute.xlu0 %771
      %773 = vrot.lane.b32.xlu0 %v738, 15
      %v774 = vpop.permute.xlu0 %773
      %v775 = vsel %vm440, %v772, %v774
      %v776 = vsel %vm440, %v774, %v772
      %777 = vrot.lane.b32.xlu0 %v737, 31
      %v778 = vpop.permute.xlu0 %777
      %779 = vrot.lane.b32.xlu0 %v738, 31
      %v780 = vpop.permute.xlu0 %779
      %v781 = vsel %vm447, %v778, %v780
      %v782 = vsel %vm447, %v780, %v778
      %v783 = vsel %vm453, %v782, %v776
      %v784 = vsel %vm454, %v781, %v775
      %v787 = vrot.slane %v783, 2
      %v788 = vrot.slane %v784, 2
      %791 = vst [vmem:[#allocation2] sm:$0xc0] %v787
      %792 = vst [vmem:[#allocation2 + $0x8] sm:$0xc0] %v788
      %793 = vst [vmem:[#allocation2 + $0x10] sm:$0x1] %v787
      %794 = vst [vmem:[#allocation2 + $0x18] sm:$0x1] %v788
      %795 = vrot.lane.b32.xlu0 %v737, 113
      %v796 = vpop.permute.xlu0 %795
      %797 = vrot.lane.b32.xlu0 %v738, 113
      %v798 = vpop.permute.xlu0 %797
      %v799 = vsel %vm471, %v796, %v798
      %v800 = vsel %vm471, %v798, %v796
      %v801 = vsel %vm415, %v799, %v752
      %v802 = vsel %vm416, %v800, %v751
      %v805 = vrot.slane %v801, 7
      %v806 = vrot.slane %v802, 7
      %809 = vst [vmem:[#allocation2 + $0x10] sm:$0xe] %v805
      %810 = vst [vmem:[#allocation2 + $0x18] sm:$0xe] %v806
      %v813 = vrot.slane %v737, 4
      %v814 = vrot.slane %v738, 4
      %817 = vst [vmem:[#allocation2 + $0x10] sm:$0x70] %v813
      %818 = vst [vmem:[#allocation2 + $0x18] sm:$0x70] %v814
      %819 = vrot.lane.b32.xlu0 %v737, 127
      %v820 = vpop.permute.xlu0 %819
      %821 = vrot.lane.b32.xlu0 %v738, 127
      %v822 = vpop.permute.xlu0 %821
      %v823 = vsel %vm496, %v820, %v822
      %v824 = vsel %vm496, %v822, %v820
      %v825 = vsel %vm453, %v776, %v823
      %v826 = vsel %vm454, %v775, %v824
      %v829 = vrot.slane %v825, 1
      %v830 = vrot.slane %v826, 1
      %833 = vst [vmem:[#allocation2 + $0x10] sm:$0x80] %v829
      %834 = vst [vmem:[#allocation2 + $0x18] sm:$0x80] %v830
      %835 = vst [vmem:[#allocation2 + $0x20] sm:$0x3] %v829
      %836 = vst [vmem:[#allocation2 + $0x28] sm:$0x3] %v830
      %837 = vrot.lane.b32.xlu0 %v737, 97
      %v838 = vpop.permute.xlu0 %837
      %839 = vrot.lane.b32.xlu0 %v738, 97
      %v840 = vpop.permute.xlu0 %839
      %v841 = vsel %vm515, %v838, %v840
      %v842 = vsel %vm515, %v840, %v838
      %v843 = vsel %vm415, %v841, %v799
      %v844 = vsel %vm416, %v842, %v800
      %v847 = vrot.slane %v843, 6
      %v848 = vrot.slane %v844, 6
      %851 = vst [vmem:[#allocation2 + $0x20] sm:$0x1c] %v847
      %852 = vst [vmem:[#allocation2 + $0x28] sm:$0x1c] %v848
      %853 = vrot.lane.b32.xlu0 %v737, 112
      %v854 = vpop.permute.xlu0 %853
      %855 = vrot.lane.b32.xlu0 %v738, 112
      %v856 = vpop.permute.xlu0 %855
      %v857 = vsel %vm532, %v854, %v856
      %v858 = vsel %vm532, %v856, %v854
      %v861 = vrot.slane %v857, 3
      %v862 = vrot.slane %v858, 3
      %865 = vst [vmem:[#allocation2 + $0x20] sm:$0xe0] %v861
      %866 = vst [vmem:[#allocation2 + $0x28] sm:$0xe0] %v862
      %867 = vrot.lane.b32.xlu0 %v737, 111
      %v868 = vpop.permute.xlu0 %867
      %869 = vrot.lane.b32.xlu0 %v738, 111
      %v870 = vpop.permute.xlu0 %869
      %v871 = vsel %vm547, %v868, %v870
      %v872 = vsel %vm547, %v870, %v868
      %v873 = vsel %vm453, %v823, %v871
      %v874 = vsel %vm454, %v824, %v872
      %875 = vst [vmem:[#allocation2 + $0x30] sm:$0x7] %v873
      %876 = vst [vmem:[#allocation2 + $0x38] sm:$0x7] %v874
      %v877 = vld [vmem:[#allocation2] sm:$0xff]
      %v878 = vld [vmem:[#allocation2 + $0x8] sm:$0xff]
      %v879 = vld [vmem:[#allocation2 + $0x10] sm:$0xff]
      %v880 = vld [vmem:[#allocation2 + $0x18] sm:$0xff]
      %v881 = vld [vmem:[#allocation2 + $0x20] sm:$0xff]
      %v882 = vld [vmem:[#allocation2 + $0x28] sm:$0xff]
      %v883 = vld [vmem:[#allocation2 + $0x30] sm:$0x7]
      %v884 = vld [vmem:[#allocation2 + $0x38] sm:$0x7]
      %886 = vset.pattern.permute.xlu0 0
      %887 = vperm.xlu0 %886, %v740
      %v888 = vpop.permute.xlu0 %887
      %v891 = vsel %vm567, %v739, 0
      %v894 = vsel %vm571, %v883, 0
      %v897 = vsel %vm571, %v884, 0
      %899 = vmatpush.msra.mxu0 0.0
      %900 = vmatpush.msra.mxu0 0.0
      %901 = vmatpush.msra.mxu0 0.0
      %902 = vmatpush.msra.mxu0 0.0
      %903 = vmatpush.msra.mxu0 0.0
      %904 = vmatpush.msra.mxu0 0.0
      %905 = vmatpush.msra.mxu0 0.0
      %906 = vmatpush.msra.mxu0 0.0
      %907 = vmatpush.msra.mxu0 0.0
      %908 = vmatpush.msra.mxu0 0.0
      %909 = vmatpush.msra.mxu0 0.0
      %910 = vmatpush.msra.mxu0 0.0
      %911 = vmatpush.msra.mxu0 %v894
      %912 = vmatpush.msra.mxu0 %v881
      %913 = vmatpush.msra.mxu0 %v879
      %914 = vmatpush.msra.mxu0 %v877
      %915 = vmatmul.f32.gmra.mxu0 %v891
      %v916 = vpop.f32.mrf.mxu0
      %v917 = vadd.f32 %v888, %v916
      %918 = vdwg.mxu0
      %919 = vmatpush.msra.mxu0 0.0
      %920 = vmatpush.msra.mxu0 0.0
      %921 = vmatpush.msra.mxu0 0.0
      %922 = vmatpush.msra.mxu0 0.0
      %923 = vmatpush.msra.mxu0 0.0
      %924 = vmatpush.msra.mxu0 0.0
      %925 = vmatpush.msra.mxu0 0.0
      %926 = vmatpush.msra.mxu0 0.0
      %927 = vmatpush.msra.mxu0 0.0
      %928 = vmatpush.msra.mxu0 0.0
      %929 = vmatpush.msra.mxu0 0.0
      %930 = vmatpush.msra.mxu0 0.0
      %931 = vmatpush.msra.mxu0 %v897
      %932 = vmatpush.msra.mxu0 %v882
      %933 = vmatpush.msra.mxu0 %v880
      %934 = vmatpush.msra.mxu0 %v878
      %935 = vmatmul.f32.gmra.mxu0 %v891
      %v936 = vpop.f32.mrf.mxu0
      %v937 = vadd.f32 %v888, %v936
      %938 = vdwg.mxu0
      %939 = vst [vmem:[%s329] sm:$0x3f] %v917
      %940 = vst [vmem:[%s329 + $0x8] sm:$0x3f] %v937
      %p941 = scmp.lt.s32.totalorder %s20, 1
      %s942 = scalar_select %p941, %s20, 1
      %s943 = smul.addr %s942, 2
      %s944 = smul.addr %s943, 8
      %s945 = scalar_lea.vmem %s9, %s944
      // Predicated region
      $region57: #{interp_conv_merge.1} parent=55 // pred_check
        %p946 = pneg %p232
      $region58: #{interp_conv_merge.1} parent=55 // pred_check_branch
        %948 = sbr.rel (%p946) target = $region60
      $region59: #{interp_conv_merge.1} parent=55 // pred_region
        _
      $region60: #{interp_conv_merge.1} parent=55 // pred_fallthru
        _
    $region56: #{interp_conv_merge.1} parent=5 // pred_fallthru
      _
    %p949 = scmp.le.s32.totalorder 2, %s15
    // Predicated region
    $region61: #{interp_conv_merge.1} parent=5 // pred_check
      %p950 = pneg %p949
    $region62: #{interp_conv_merge.1} parent=5 // pred_check_branch
      %952 = sbr.rel (%p950) target = $region64
    $region63: #{interp_conv_merge.1} parent=5 // pred_region
      %s953 = ssub.s32 %s15, 2
      // Predicated region
      $region65: #{interp_conv_merge.1} parent=63 // pred_check
        %p954 = pneg %p238
      $region66: #{interp_conv_merge.1} parent=63 // pred_check_branch
        %956 = sbr.rel (%p954) target = $region68
      $region67: #{interp_conv_merge.1} parent=63 // pred_region
        %p957 = scmp.lt.s32.totalorder %s21, 1
        %s958 = scalar_select %p957, %s21, 1
        %s959 = smul.addr %s958, 2
        %s960 = smul.addr %s959, 8
        %s961 = scalar_lea.vmem %s9, %s960
      $region68: #{interp_conv_merge.1} parent=63 // pred_fallthru
        _
    $region64: #{interp_conv_merge.1} parent=5 // pred_fallthru
      _
  $region6: #{interp_conv_merge.1} parent=0 // loop_footer
    %s19 = sadd.s32 1, %s15
  $region7: #{interp_conv_merge.1} parent=0 // loop_footer_branch
    %14 = sbr.rel target = $region3
  $region8: #{interp_conv_merge.1} parent=0 // loop_exit
    _

</llo_original>
